<compile_context>
chip_gen: v7x
topology: tpu7x:2x2x1
jax: 0.10.0
libtpu: 0.0.40
codegen_flags: <defaults>
</compile_context>

<pallas_src>
from functools import partial

import numpy as np

import jax
import jax.numpy as jnp
from jax.experimental import pallas as pl
from jax.experimental.pallas import tpu as pltpu


_MAX_LANES = 32768                      # cap on the flattened lane-dense last dim
_TARGET_BLOCK_BYTES = 8 * 1024 * 1024   # ~8 MiB/block -> 2 in + 2 out buffers ~= 32 MiB
_VMEM_LIMIT_BYTES = 48 * 1024 * 1024    # safe on v5e/v6e (128 MiB) and v7x (64 MiB phys)


def _copy_kernel(x_ref, o_ref):
    # Pure data movement: one lane-dense tile in, same tile out.
    o_ref[...] = x_ref[...]


def _lane_dense_lanes(n):
    """Largest multiple-of-128 divisor of n (capped), or 0 if none exists."""
    best = 0
    lane = 128
    cap = min(_MAX_LANES, n)
    while lane <= cap:
        if n % lane == 0:
            best = lane
        lane += 128
    return best


def _row_tile(rows, lanes, itemsize):
    """Row-tile that is a multiple of the dtype's packed sublane count
    (8 for f32, 16 for bf16, 32 for int8/fp8), ~_TARGET_BLOCK_BYTES per block,
    and (for large arrays) leaves at least 2 grid steps for v7x's 2 TCs."""
    sub = 8 * max(1, 4 // int(itemsize))
    if rows <= sub:
        return rows                      # block == full dim -> always legal
    budget_rows = max(sub, _TARGET_BLOCK_BYTES // (lanes * itemsize))
    rt = min(rows, budget_rows)
    rt = max(sub, (rt // sub) * sub)
    if rt >= rows and rows >= 2 * sub:
        # Split into >=2 grid steps so both v7x TensorCores can issue DMAs.
        rt = max(sub, ((rows // 2) // sub) * sub)
    return rt


@partial(jax.jit, static_argnames=("out_shape",))
def _pallas_copy_reshape(x, *, out_shape):
    """Materialized copy: Pallas identity kernel over a lane-dense 2-D view,
    then a metadata-only reshape to the split shape."""
    n = int(np.prod(x.shape)) if x.ndim > 0 else 1
    itemsize = int(jnp.dtype(x.dtype).itemsize)

    lanes = _lane_dense_lanes(n)
    if lanes == 0:
        # No multiple-of-128 divisor: a copy kernel would take the masked
        # vst.msk path (~4.5x slower stores) and the op needs no data movement
        # anyway -> free metadata reshape.
        return jnp.reshape(x, out_shape)

    rows = n // lanes
    rt = _row_tile(rows, lanes, itemsize)

    x2d = jnp.reshape(x, (rows, lanes))  # contiguous row-major: free view

    y2d = pl.pallas_call(
        _copy_kernel,
        out_shape=jax.ShapeDtypeStruct((rows, lanes), x.dtype),
        grid=(pl.cdiv(rows, rt),),
        in_specs=[pl.BlockSpec((rt, lanes), lambda r: (r, 0))],
        out_specs=pl.BlockSpec((rt, lanes), lambda r: (r, 0)),
        input_output_aliases={0: 0},     # reuse the input HBM buffer when donatable
        cost_estimate=pl.CostEstimate(
            flops=0, transcendentals=0, bytes_accessed=2 * n * itemsize),
        compiler_params=pltpu.CompilerParams(
            dimension_semantics=("parallel",),   # megacore can shard the row axis
            vmem_limit_bytes=_VMEM_LIMIT_BYTES,
        ),
    )(x2d)

    return jnp.reshape(y2d, out_shape)   # metadata-only


def split_dim_pallas(x, dim, new_shape, materialize=False):
    """Pallas/JAX equivalent of split_dim(torch_in, dim, new_shape)."""
    sh = list(x.shape)
    if dim < 0:
        dim = len(sh) + dim
    assert 0 <= dim < len(sh)
    assert sh[dim] == int(np.prod(new_shape)), [sh[dim], list(new_shape), dim]
    out_shape = tuple(sh[:dim] + [int(d) for d in new_shape] + sh[dim + 1:])

    if not materialize or int(np.prod(out_shape)) == 0:
        # SplitDim == torch .view(): pure metadata reshape on a contiguous
        # row-major array -> zero HBM traffic.  (Primary perf-review change.)
        return jnp.reshape(x, out_shape)

    return _pallas_copy_reshape(x, out_shape=out_shape)


class SplitDimPallas:
    """Mirror of the PyTorch SplitDim module (no parameters)."""

    def __init__(self, dim, new_shape, materialize=False):
        self.dim = dim
        self.new_shape = [int(d) for d in new_shape]
        assert sum(int(d == -1) for d in self.new_shape) <= 1, \
            'Only one dimension can be negative: %s' % self.new_shape
        self.idx, = np.nonzero([d == -1 for d in self.new_shape])
        self.materialize = materialize

    def __call__(self, x):
        new_sh = list(self.new_shape)
        if len(self.idx) > 0:
            new_sh[self.idx[0]] = 1
            new_sh[self.idx[0]] = int(x.shape[self.dim] // int(np.prod(new_sh)))
        return split_dim_pallas(x, self.dim, new_sh, materialize=self.materialize)


if __name__ == "__main__":
    k0, k1 = jax.random.split(jax.random.PRNGKey(0))

    # Case 1: default fast path (free metadata reshape).
    #         (batch=2, seq=8, hidden=32), dim=-1, new_shape=[4, -1] -> (2, 8, 4, 8).
    x = jax.random.normal(k0, (2, 8, 32), dtype=jnp.float32)
    mod = SplitDimPallas(dim=-1, new_shape=[4, -1])
    y = jax.block_until_ready(mod(x))
    assert y.shape == (2, 8, 4, 8), y.shape
    assert jnp.array_equal(y, jnp.reshape(x, (2, 8, 4, 8))), "mismatch vs reference reshape"

    # Case 2: Pallas identity-copy path (materialize=True).
    #         NCHW-style (2, 4, 16, 16), split channels (dim=1) into (2, 2).
    x2 = jax.random.normal(k1, (2, 4, 16, 16), dtype=jnp.float32)
    mod2 = SplitDimPallas(dim=1, new_shape=[2, 2], materialize=True)
    y2 = jax.block_until_ready(mod2(x2))
    assert y2.shape == (2, 2, 2, 16, 16), y2.shape
    assert jnp.array_equal(y2, jnp.reshape(x2, (2, 2, 2, 16, 16))), "mismatch vs reference reshape"

    # Case 3: bf16 materialized copy exercises dtype-aware sublane rounding.
    x3 = jax.random.normal(k0, (4, 8, 32), dtype=jnp.float32).astype(jnp.bfloat16)
    y3 = jax.block_until_ready(split_dim_pallas(x3, 1, [2, 4], materialize=True))
    assert y3.shape == (4, 2, 4, 32), y3.shape
    assert jnp.array_equal(y3, jnp.reshape(x3, (4, 2, 4, 32))), "mismatch vs reference reshape"

    print("KERNEL_OK")
</pallas_src>

<mosaic_0001>
module attributes {stable_mosaic.version = 11 : i64} {
  func.func @_copy_kernel(%arg0: i32, %arg1: memref<1x2048xf32, #tpu.memory_space<vmem>>, %arg2: memref<1x2048xf32, #tpu.memory_space<vmem>>) attributes {dimension_semantics = [#tpu.dimension_semantics<parallel>], iteration_bounds = array<i64: 1>, scalar_prefetch = 0 : i64, scratch_operands = 0 : i64, tpu.core_type = #tpu.core_type<tc>, window_params = [{transform_indices = @transform_0, window_bounds = array<i64: 1, 2048>}, {transform_indices = @transform_1, window_bounds = array<i64: 1, 2048>}]} {
    %c0 = arith.constant 0 : index
    %c0_0 = arith.constant 0 : index
    %0 = vector.load %arg1[%c0, %c0_0] : memref<1x2048xf32, #tpu.memory_space<vmem>>, vector<1x2048xf32>
    %c0_1 = arith.constant 0 : index
    %c0_2 = arith.constant 0 : index
    %1 = vector.load %arg2[%c0_1, %c0_2] : memref<1x2048xf32, #tpu.memory_space<vmem>>, vector<1x2048xf32>
    tpu.vector_store %arg2[%c0_1, %c0_2], %0 {strides = array<i32>} : memref<1x2048xf32, #tpu.memory_space<vmem>>, vector<1x2048xf32>,
    return
  }
  func.func @transform_0(%arg0: i32) -> (i32, i32) {
    %c0_i32 = arith.constant 0 : i32
    %c0_i32_0 = arith.constant 0 : i32
    return %arg0, %c0_i32 : i32, i32
  }
  func.func @transform_1(%arg0: i32) -> (i32, i32) {
    %c0_i32 = arith.constant 0 : i32
    %c0_i32_0 = arith.constant 0 : i32
    return %arg0, %c0_i32 : i32, i32
  }
}

</mosaic_0001>

<llo_original>
// kernel: _pallas_copy_reshape.1
$region0: #{_pallas_copy_reshape.1}
  #allocation0 [shape = 'u32[]', space=smem, size = 0x4, offset = 0x4, fixed_abs, tag = 'smem constant byte address 0x4 - core index']
  #allocation1 [shape = 'u32[144,128]{1,0:T(1,128)}', space=vmem, size = 0x12000, scoped, tag = 'internal scratch']
  %s0 = inlined_call_operand.vmem [shape: f32[1,2048], index: 0, kind: input, shape index: {}, may-alias: {0,1}]
  %s1 = inlined_call_operand.vmem [shape: f32[1,2048], index: 1, kind: output, shape index: {}, may-alias: {0,1}]
  %s2 = sld [smem:[#allocation0]]
  $region14: #{_pallas_copy_reshape.1} parent=0
    _
  %s4 = ssub.s32 1, %s2
  %s5 = scalar_select 0, %s4, %s2
  // Predicated region
  $region2: #{_pallas_copy_reshape.1} parent=0 // pred_check
    _
  $region3: #{_pallas_copy_reshape.1} parent=0 // pred_check_branch
    %7 = sbr.rel (0) target = $region5
  $region4: #{_pallas_copy_reshape.1} parent=0 // pred_region
    _
  $region5: #{_pallas_copy_reshape.1} parent=0 // pred_fallthru
    _
  %v8 = vld [vmem:[%s0] sm:$0xff]
  %v9 = vld [vmem:[%s0 + $0x8] sm:$0xff]
  %10 = vst [vmem:[%s1] sm:$0xff] %v8
  %11 = vst [vmem:[%s1 + $0x8] sm:$0xff] %v9
  // Predicated region
  $region6: #{_pallas_copy_reshape.1} parent=0 // pred_check
    _
  $region7: #{_pallas_copy_reshape.1} parent=0 // pred_check_branch
    %13 = sbr.rel (0) target = $region9
  $region8: #{_pallas_copy_reshape.1} parent=0 // pred_region
    _
  $region9: #{_pallas_copy_reshape.1} parent=0 // pred_fallthru
    _
  // Predicated region
  $region10: #{_pallas_copy_reshape.1} parent=0 // pred_check
    _
  $region11: #{_pallas_copy_reshape.1} parent=0 // pred_check_branch
    %15 = sbr.rel (0) target = $region13
  $region12: #{_pallas_copy_reshape.1} parent=0 // pred_region
    _
  $region13: #{_pallas_copy_reshape.1} parent=0 // pred_fallthru
    _

</llo_original>
